<compile_context>
chip_gen: v5e
topology: v5e:2x2
jax: 0.10.0
libtpu: 0.0.40
codegen_flags: <defaults>
</compile_context>

<pallas_src>
import numpy as np
import jax
import jax.numpy as jnp
from jax.experimental import pallas as pl
from jax.experimental.pallas import tpu as pltpu


_KRON_MAX_HW_BF16 = 256   # dense Kronecker-matmul path for planes up to 16x16
_KRON_MAX_HW_F32 = 64     # f32: keep the ~HW/4 FLOP inflation off the MXU roofline


def _bilinear_upsample_matrix(n: int) -> np.ndarray:
    """(2n, n) matrix: 2x bilinear upsample, align_corners=False (PyTorch default)."""
    a = np.zeros((2 * n, n), dtype=np.float32)
    for i in range(n):
        # even output row 2i: src = i - 0.25 -> 0.25*in[i-1] + 0.75*in[i] (edge clamp)
        a[2 * i, max(i - 1, 0)] += 0.25
        a[2 * i, i] += 0.75
        # odd output row 2i+1: src = i + 0.25 -> 0.75*in[i] + 0.25*in[i+1]
        a[2 * i + 1, i] += 0.75
        a[2 * i + 1, min(i + 1, n - 1)] += 0.25
    return a


def _round_up(a: int, b: int) -> int:
    return (a + b - 1) // b * b


def _tpu_tuning():
    """(scoped VMEM limit, per-step budget, min grid steps, prefer-even-steps)."""
    # Conservative defaults are v7x-safe (64 MiB VMEM, 2 TensorCores / chip).
    limit, budget, min_steps, prefer_even = 32 << 20, 16 << 20, 4, True
    try:
        cap = getattr(pltpu.get_tpu_info(), "vmem_capacity_bytes", 0)
        if cap >= (96 << 20):        # v5e / v6e: 128 MiB physical, single TensorCore
            limit, budget, min_steps, prefer_even = 96 << 20, 40 << 20, 2, False
    except Exception:
        pass
    return limit, budget, min_steps, prefer_even


def _choose_channel_block(nc, per_channel_bytes, budget_bytes, min_steps, prefer_even):
    """Channel-block size: multiple of 8, fits the VMEM budget, multi-step grid."""
    if nc <= 8:
        return nc                     # full-extent block is the only legal choice
    cap = int(budget_bytes // max(int(per_channel_bytes), 1))
    cap = max(8, (min(cap, nc) // 8) * 8)

    def n_steps(tc):
        return -(-nc // tc)

    def key(tc):
        s = n_steps(tc)
        good = s >= min_steps and (s % 2 == 0 or not prefer_even)
        tier = 1 if good else (0 if s >= 2 else -1)   # never prefer a 1-step grid
        # Within a tier prefer exact divisors (balanced steps), then larger blocks.
        return (tier, int(nc % tc == 0), tc)

    return max(range(8, cap + 1, 8), key=key)


# --------------------------------- kernels -----------------------------------

def _kron_upsample_add_kernel(kt_ref, x_ref, low_ref, o_ref):
    # kt: (HW, 4HW) = (A_h (x) A_w)^T; x: (TC, HW); low/o: (TC, 4HW) lane-dense.
    up = jnp.dot(x_ref[...], kt_ref[...], preferred_element_type=jnp.float32)
    o_ref[...] = (up + low_ref[...].astype(jnp.float32)).astype(o_ref.dtype)


def _sep_upsample_add_kernel(awt_ref, x_ref, low_ref, o_ref):
    # awt: (W, 2W) = A_w^T; x: (H, TC, W) (spatial-row major so every shift is
    # sublane aligned); low/o: (TC, 2H*2W) lane-dense channel slabs.
    h, tc, w = x_ref.shape
    ow = awt_ref.shape[1]
    # --- W direction: ONE folded (H*TC, W) @ (W, 2W) MXU matmul, f32 accumulate.
    # (tc is 8-aligned, so this reshape is layout preserving.)
    xf = x_ref[...].reshape(h * tc, w)
    t = jnp.dot(xf, awt_ref[...], preferred_element_type=jnp.float32)    # (H*TC, 2W)
    # --- H direction: 2-tap bilinear filter via 8-aligned sublane shifts + VPU.
    t_prev = jnp.concatenate([t[:tc], t[:(h - 1) * tc]], axis=0)   # row r-1, clamped
    t_next = jnp.concatenate([t[tc:], t[(h - 1) * tc:]], axis=0)   # row r+1, clamped
    even = 0.75 * t + 0.25 * t_prev          # output rows 2r
    odd = 0.75 * t + 0.25 * t_next           # output rows 2r+1
    # --- Interleave rows straight into the lane-dense output slab.
    # Trace-time loop (h <= ~56 for this model): 2H in-VMEM masked stores per
    # step, but the HBM writeback stays a single dense (TC, 4HW) DMA.
    for r in range(h):
        rows = slice(r * tc, (r + 1) * tc)
        ev = slice((2 * r) * ow, (2 * r + 1) * ow)
        od = slice((2 * r + 1) * ow, (2 * r + 2) * ow)
        o_ref[:, ev] = (even[rows]
                        + low_ref[:, ev].astype(jnp.float32)).astype(o_ref.dtype)
        o_ref[:, od] = (odd[rows]
                        + low_ref[:, od].astype(jnp.float32)).astype(o_ref.dtype)


# --------------------------------- wrapper ------------------------------------

def upsample_add(x: jax.Array, low_map: jax.Array) -> jax.Array:
    """nn.Upsample(scale_factor=2, mode='bilinear')(x) + low_map, NCHW layout."""
    n, c, h, w = x.shape
    oh, ow = 2 * h, 2 * w
    assert low_map.shape == (n, c, oh, ow), (x.shape, low_map.shape)
    nc, hw, ohw = n * c, h * w, oh * ow
    out_dtype = jnp.result_type(x.dtype, low_map.dtype)
    is_bf16 = x.dtype == jnp.dtype(jnp.bfloat16)
    # Interpolation weights are exact in bf16; keep MXU operands narrow for bf16.
    mat_dtype = jnp.bfloat16 if is_bf16 else jnp.float32
    xi, li, oi, mi = (jnp.dtype(d).itemsize
                      for d in (x.dtype, low_map.dtype, out_dtype, mat_dtype))
    vmem_limit, budget, min_steps, prefer_even = _tpu_tuning()
    compiler_params = pltpu.CompilerParams(
        dimension_semantics=("parallel",), vmem_limit_bytes=vmem_limit)
    a_h = _bilinear_upsample_matrix(h)       # (2H, H)
    a_w = _bilinear_upsample_matrix(w)       # (2W, W)
    kron_max = _KRON_MAX_HW_BF16 if is_bf16 else _KRON_MAX_HW_F32
    low2 = low_map.reshape(nc, ohw)          # free reshape (contiguous dims)

    # ---- Path 1: small planes -> one lane-dense Kronecker matmul per block ----
    if hw <= kron_max or h < 2 or w < 2:
        hw_pad, ohw_pad = _round_up(hw, 128), _round_up(ohw, 128)
        # TODO(synk): pipeline_mode=pl.Buffered(1) on the constant K^T operand would
        # free its second buffer; kept at the default and accounted for in the budget.
        kt_bytes = 2 * _round_up(hw, 8) * ohw_pad * mi
        per_c = 2 * hw_pad * xi + 2 * ohw_pad * (li + oi) + 4 * ohw_pad
        tc = _choose_channel_block(nc, per_c, max(budget - kt_bytes, per_c),
                                   min_steps, prefer_even)
        kt = jnp.asarray(np.kron(a_h, a_w).T, dtype=mat_dtype)   # (HW, 4HW)
        x2 = x.reshape(nc, hw)
        out2 = pl.pallas_call(
            _kron_upsample_add_kernel,
            out_shape=jax.ShapeDtypeStruct((nc, ohw), out_dtype),
            grid_spec=pltpu.PrefetchScalarGridSpec(
                num_scalar_prefetch=0,
                grid=(pl.cdiv(nc, tc),),
                in_specs=[
                    pl.BlockSpec((hw, ohw), lambda i: (0, 0)),   # K^T (fetched once)
                    pl.BlockSpec((tc, hw), lambda i: (i, 0)),    # x channel block
                    pl.BlockSpec((tc, ohw), lambda i: (i, 0)),   # low_map slab
                ],
                out_specs=pl.BlockSpec((tc, ohw), lambda i: (i, 0)),
            ),
            compiler_params=compiler_params,
            cost_estimate=pl.CostEstimate(
                flops=int(2 * nc * hw * ohw), transcendentals=0,
                bytes_accessed=int(nc * (hw * xi + ohw * (li + oi)) + hw * ohw * mi)),
        )(kt, x2, low2)
        return out2.reshape(n, c, oh, ow)

    # ---- Path 2: larger planes -> folded W matmul + shift-based H pass --------
    # x is re-laid out (NC,H,W) -> (H,NC,W) once here (one extra HBM pass over the
    # smallest operand) so every in-kernel slice/shift is 8-sublane aligned.
    # TODO(synk): for very large planes (H,W >= ~512, never reached by this model)
    # add an output-row grid axis so a tc=8 block still respects the VMEM budget.
    w_pad, ow_pad, ohw_pad = _round_up(w, 128), _round_up(ow, 128), _round_up(ohw, 128)
    awt_bytes = 2 * _round_up(w, 8) * ow_pad * mi
    per_c = (2 * h * w_pad * xi              # double-buffered x block
             + 2 * ohw_pad * (li + oi)       # double-buffered low / out slabs
             + 5 * h * ow_pad * 4)           # f32 temporaries (t/prev/next/even/odd)
    tc = _choose_channel_block(nc, per_c, max(budget - awt_bytes, per_c),
                               min_steps, prefer_even)
    a_wt = jnp.asarray(a_w.T, dtype=mat_dtype)                   # (W, 2W)
    x_t = jnp.transpose(x.reshape(nc, h, w), (1, 0, 2))          # (H, NC, W)
    out2 = pl.pallas_call(
        _sep_upsample_add_kernel,
        out_shape=jax.ShapeDtypeStruct((nc, ohw), out_dtype),
        grid_spec=pltpu.PrefetchScalarGridSpec(
            num_scalar_prefetch=0,
            grid=(pl.cdiv(nc, tc),),
            in_specs=[
                pl.BlockSpec((w, ow), lambda i: (0, 0)),         # A_w^T (fetched once)
                pl.BlockSpec((h, tc, w), lambda i: (0, i, 0)),   # x channel block
                pl.BlockSpec((tc, ohw), lambda i: (i, 0)),       # low_map slab
            ],
            out_specs=pl.BlockSpec((tc, ohw), lambda i: (i, 0)),
        ),
        compiler_params=compiler_params,
        cost_estimate=pl.CostEstimate(
            flops=int(2 * nc * h * w * ow + 6 * nc * ohw), transcendentals=0,
            bytes_accessed=int(nc * (hw * xi + ohw * (li + oi)) + w * ow * mi)),
    )(a_wt, x_t, low2)
    return out2.reshape(n, c, oh, ow)


if __name__ == "__main__":
    key = jax.random.PRNGKey(0)
    ks = jax.random.split(key, 8)

    def ref_upsample_add(xv, lowv):
        nn_, cc_, hh_, ww_ = xv.shape
        up = jax.image.resize(xv.astype(jnp.float32),
                              (nn_, cc_, 2 * hh_, 2 * ww_), method="bilinear")
        return up + lowv.astype(jnp.float32)

    def check(xv, lowv, tol):
        out = jax.block_until_ready(upsample_add(xv, lowv))
        ref = ref_upsample_add(xv, lowv)
        np.testing.assert_allclose(np.asarray(out, dtype=np.float32),
                                   np.asarray(ref), rtol=tol, atol=tol)

    # Path 1 (Kronecker matmul), f32 + bf16, small 8x8 planes.
    x = jax.random.normal(ks[0], (2, 16, 8, 8), dtype=jnp.float32)
    low = jax.random.normal(ks[1], (2, 16, 16, 16), dtype=jnp.float32)
    check(x, low, 1e-5)
    check(x.astype(jnp.bfloat16), low.astype(jnp.bfloat16), 5e-2)

    # Path 1 with a non-dividing channel count (partial last grid block).
    x = jax.random.normal(ks[2], (1, 20, 8, 8), dtype=jnp.float32)
    low = jax.random.normal(ks[3], (1, 20, 16, 16), dtype=jnp.float32)
    check(x, low, 1e-5)

    # Path 2 (folded W matmul + shift-based H pass), f32 + bf16, 24x24 planes.
    x = jax.random.normal(ks[4], (2, 8, 24, 24), dtype=jnp.float32)
    low = jax.random.normal(ks[5], (2, 8, 48, 48), dtype=jnp.float32)
    check(x, low, 1e-5)
    check(x.astype(jnp.bfloat16), low.astype(jnp.bfloat16), 5e-2)

    # Path 2 at the model's real mid-level plane size (14x14 -> 28x28, f32).
    x = jax.random.normal(ks[6], (2, 16, 14, 14), dtype=jnp.float32)
    low = jax.random.normal(ks[7], (2, 16, 28, 28), dtype=jnp.float32)
    check(x, low, 1e-5)

    print("KERNEL_OK")
</pallas_src>

<mosaic_0001>
module attributes {stable_mosaic.version = 11 : i64} {
  func.func @_kron_upsample_add_kernel(%arg0: i32, %arg1: memref<64x256xf32, #tpu.memory_space<vmem>>, %arg2: memref<8x64xf32, #tpu.memory_space<vmem>>, %arg3: memref<8x256xf32, #tpu.memory_space<vmem>>, %arg4: memref<8x256xf32, #tpu.memory_space<vmem>>) attributes {dimension_semantics = [#tpu.dimension_semantics<parallel>], iteration_bounds = array<i64: 4>, scalar_prefetch = 0 : i64, scratch_operands = 0 : i64, tpu.core_type = #tpu.core_type<tc>, window_params = [{pipeline_mode = #tpu.pipeline_mode<synchronous>, transform_indices = @transform_0, window_bounds = array<i64: 64, 256>}, {transform_indices = @transform_1, window_bounds = array<i64: 8, 64>}, {transform_indices = @transform_2, window_bounds = array<i64: 8, 256>}, {transform_indices = @transform_3, window_bounds = array<i64: 8, 256>}]} {
    %c0 = arith.constant 0 : index
    %c0_0 = arith.constant 0 : index
    %0 = vector.load %arg2[%c0, %c0_0] : memref<8x64xf32, #tpu.memory_space<vmem>>, vector<8x64xf32>
    %c0_1 = arith.constant 0 : index
    %c0_2 = arith.constant 0 : index
    %1 = vector.load %arg1[%c0_1, %c0_2] : memref<64x256xf32, #tpu.memory_space<vmem>>, vector<64x256xf32>
    %cst = arith.constant dense<0.000000e+00> : vector<8x256xf32>
    %2 = tpu.matmul %0, %1, %cst {dimension_numbers = #tpu.dot_dimension_numbers<[1], [0], [0], [1], [0, 0, 1, 1], [], []>} : vector<8x64xf32>, vector<64x256xf32>, vector<8x256xf32> -> vector<8x256xf32>
    %c0_3 = arith.constant 0 : index
    %c0_4 = arith.constant 0 : index
    %3 = vector.load %arg3[%c0_3, %c0_4] : memref<8x256xf32, #tpu.memory_space<vmem>>, vector<8x256xf32>
    %4 = arith.addf %2, %3 : vector<8x256xf32>
    %c0_5 = arith.constant 0 : index
    %c0_6 = arith.constant 0 : index
    %5 = vector.load %arg4[%c0_5, %c0_6] : memref<8x256xf32, #tpu.memory_space<vmem>>, vector<8x256xf32>
    tpu.vector_store %arg4[%c0_5, %c0_6], %4 {strides = array<i32>} : memref<8x256xf32, #tpu.memory_space<vmem>>, vector<8x256xf32>,
    return
  }
  func.func @transform_0(%arg0: i32) -> (i32, i32) {
    %c0_i32 = arith.constant 0 : i32
    %c0_i32_0 = arith.constant 0 : i32
    %c0_i32_1 = arith.constant 0 : i32
    return %c0_i32, %c0_i32_0 : i32, i32
  }
  func.func @transform_1(%arg0: i32) -> (i32, i32) {
    %c0_i32 = arith.constant 0 : i32
    %c0_i32_0 = arith.constant 0 : i32
    return %arg0, %c0_i32 : i32, i32
  }
  func.func @transform_2(%arg0: i32) -> (i32, i32) {
    %c0_i32 = arith.constant 0 : i32
    %c0_i32_0 = arith.constant 0 : i32
    return %arg0, %c0_i32 : i32, i32
  }
  func.func @transform_3(%arg0: i32) -> (i32, i32) {
    %c0_i32 = arith.constant 0 : i32
    %c0_i32_0 = arith.constant 0 : i32
    return %arg0, %c0_i32 : i32, i32
  }
}

</mosaic_0001>

<llo_original>
// kernel: tpu_custom_call.1
$region0: #{tpu_custom_call.1}
  #allocation0 [shape = 'u32[]', space=smem, size = 0x4, offset = 0x4, fixed_abs, tag = 'smem constant byte address 0x4 - core index']
  #allocation1 [shape = 'u32[72,128]{1,0:T(1,128)}', space=vmem, size = 0x9000, scoped, tag = 'internal scratch']
  %s0 = inlined_call_operand.hbm [shape: f32[64,256], index: 0, kind: input, shape index: {}]
  %s1 = inlined_call_operand.hbm [shape: f32[32,64], index: 1, kind: input, shape index: {}]
  %s2 = inlined_call_operand.hbm [shape: f32[32,256], index: 2, kind: input, shape index: {}]
  %s3 = inlined_call_operand.hbm [shape: f32[32,256], index: 3, kind: output, shape index: {}]
  %s4 = sld [smem:[#allocation0]]
  $region57: #{tpu_custom_call.1} parent=0
    _
  %s6 = ssub.s32 1, %s4
  %s7 = scalar_select 0, %s6, %s4
  $region1: #{tpu_custom_call.1} parent=0
    #allocation2 [shape = 'u8[65536]{0}', space=vmem, size = 0x10000, scoped, tag = 'input window, operand 0, single buffered']
    #allocation3 [shape = 's32[2]{0}', space=sflag, size = 0x8, scoped, tag = 'scoped memory for tpu_custom_call.1']
    #allocation4 [shape = 's32[2]{0}', space=sflag, size = 0x8, scoped, tag = 'scoped memory for tpu_custom_call.1']
    #allocation5 [shape = 'u8[8192]{0}', space=vmem, size = 0x2000, scoped, tag = 'input window, operand 1']
    #allocation6 [shape = 's32[2]{0}', space=sflag, size = 0x8, scoped, tag = 'scoped memory for tpu_custom_call.1']
    #allocation7 [shape = 'u8[16384]{0}', space=vmem, size = 0x4000, scoped, tag = 'input window, operand 2']
    #allocation8 [shape = 'u8[16384]{0}', space=vmem, size = 0x4000, scoped, tag = 'output window, operand 0']
    %8 = vsyncpa [#allocation3], 0
    %9 = vsyncpa [#allocation6], 0
    %s10 = scalar_lea.sflag [#allocation6], 1
    %11 = vsyncpa %s10, 0
    %12 = vsyncpa [#allocation4], 0
    %s13 = scalar_lea.sflag [#allocation4], 1
    %14 = vsyncpa %s13, 0
    loop: start=0, step=1, limit=6
    $region2: #{tpu_custom_call.1} parent=1 // loop_pre_header
      _
    $region3: #{tpu_custom_call.1} parent=1 // loop_header
      %s16 = sphi 0, %s20
      %p17 = scmp.ge.s32.totalorder %s16, 6
      %s24 = sphi 0, %s24
      %s26 = sphi 0, %s24
      %s27 = sphi 0, %s26
      %s41 = sphi 0, %s27
      %s47 = sphi 0, %s49
      %s50 = sphi 0, %s47
      %s51 = sphi 0, %s50
      %s67 = sphi 0, %s51
      %s73 = sphi 0, %s75
      %s76 = sphi 0, %s73
      %s77 = sphi 0, %s76
      %s93 = sphi 0, %s77
      %s99 = sphi 0, %s101
      %s102 = sphi 0, %s99
      %s103 = sphi 0, %s102
      %s119 = sphi 0, %s103
    $region4: #{tpu_custom_call.1} parent=1 // loop_header_branch
      %19 = sbr.rel (%p17) target = $region8
    $region5: #{tpu_custom_call.1} parent=1 // loop_body
      %s21 = ssub.s32 %s16, 1
      %s22 = ssub.s32 %s16, 2
      %s23 = sadd.s32 %s16, 1
      %s25 = sadd.s32 %s24, 1
      %p28 = scmp.eq.s32.totalorder %s16, 3
      %p29 = scmp.ne.s32.totalorder %s24, %s26
      %p30 = scmp.eq.s32.totalorder %s16, 0
      %p31 = por %p29, %p30
      %p32 = scmp.ne.s32.totalorder %s24, %s26
      %p33 = scmp.eq.s32.totalorder %s21, 3
      %p34 = por %p32, %p33
      %p35 = scmp.ne.s32.totalorder %s26, %s27
      %p36 = scmp.eq.s32.totalorder %s21, 0
      %p37 = por %p35, %p36
      %p38 = scmp.ne.s32.totalorder %s26, %s27
      %p39 = scmp.eq.s32.totalorder %s22, 3
      %p40 = por %p38, %p39
      %p42 = scmp.ne.s32.totalorder %s27, %s41
      %p43 = scmp.eq.s32.totalorder %s22, 0
      %p44 = por %p42, %p43
      %s45 = ssub.s32 %s16, %s23
      %p46 = scmp.eq.s32.totalorder %s45, 0
      %s48 = sadd.s32 %s47, 1
      %s49 = scalar_select %p46, %s47, %s48
      %p52 = pneg %p46
      %p53 = scmp.eq.s32.totalorder %s16, 3
      %p54 = por %p52, %p53
      %p55 = scmp.ne.s32.totalorder %s47, %s50
      %p56 = scmp.eq.s32.totalorder %s16, 0
      %p57 = por %p55, %p56
      %p58 = scmp.ne.s32.totalorder %s47, %s50
      %p59 = scmp.eq.s32.totalorder %s21, 3
      %p60 = por %p58, %p59
      %p61 = scmp.ne.s32.totalorder %s50, %s51
      %p62 = scmp.eq.s32.totalorder %s21, 0
      %p63 = por %p61, %p62
      %p64 = scmp.ne.s32.totalorder %s50, %s51
      %p65 = scmp.eq.s32.totalorder %s22, 3
      %p66 = por %p64, %p65
      %p68 = scmp.ne.s32.totalorder %s51, %s67
      %p69 = scmp.eq.s32.totalorder %s22, 0
      %p70 = por %p68, %p69
      %s71 = ssub.s32 %s16, %s23
      %p72 = scmp.eq.s32.totalorder %s71, 0
      %s74 = sadd.s32 %s73, 1
      %s75 = scalar_select %p72, %s73, %s74
      %p78 = pneg %p72
      %p79 = scmp.eq.s32.totalorder %s16, 3
      %p80 = por %p78, %p79
      %p81 = scmp.ne.s32.totalorder %s73, %s76
      %p82 = scmp.eq.s32.totalorder %s16, 0
      %p83 = por %p81, %p82
      %p84 = scmp.ne.s32.totalorder %s73, %s76
      %p85 = scmp.eq.s32.totalorder %s21, 3
      %p86 = por %p84, %p85
      %p87 = scmp.ne.s32.totalorder %s76, %s77
      %p88 = scmp.eq.s32.totalorder %s21, 0
      %p89 = por %p87, %p88
      %p90 = scmp.ne.s32.totalorder %s76, %s77
      %p91 = scmp.eq.s32.totalorder %s22, 3
      %p92 = por %p90, %p91
      %p94 = scmp.ne.s32.totalorder %s77, %s93
      %p95 = scmp.eq.s32.totalorder %s22, 0
      %p96 = por %p94, %p95
      %s97 = ssub.s32 %s16, %s23
      %p98 = scmp.eq.s32.totalorder %s97, 0
      %s100 = sadd.s32 %s99, 1
      %s101 = scalar_select %p98, %s99, %s100
      %p104 = pneg %p98
      %p105 = scmp.eq.s32.totalorder %s16, 3
      %p106 = por %p104, %p105
      %p107 = scmp.ne.s32.totalorder %s99, %s102
      %p108 = scmp.eq.s32.totalorder %s16, 0
      %p109 = por %p107, %p108
      %p110 = scmp.ne.s32.totalorder %s99, %s102
      %p111 = scmp.eq.s32.totalorder %s21, 3
      %p112 = por %p110, %p111
      %p113 = scmp.ne.s32.totalorder %s102, %s103
      %p114 = scmp.eq.s32.totalorder %s21, 0
      %p115 = por %p113, %p114
      %p116 = scmp.ne.s32.totalorder %s102, %s103
      %p117 = scmp.eq.s32.totalorder %s22, 3
      %p118 = por %p116, %p117
      %p120 = scmp.ne.s32.totalorder %s103, %s119
      %p121 = scmp.eq.s32.totalorder %s22, 0
      %p122 = por %p120, %p121
      %p123 = scmp.le.s32.totalorder 1, %s16
      %p124 = scmp.lt.s32.totalorder %s16, 5
      %p125 = pnand %p123, %p124
      %p126 = pneg %p125
      // Predicated region
      $region9: #{tpu_custom_call.1} parent=5 // pred_check
        _
      $region10: #{tpu_custom_call.1} parent=5 // pred_check_branch
        %128 = sbr.rel (%p125) target = $region12
      $region11: #{tpu_custom_call.1} parent=5 // pred_region
        %s129 = ssub.s32 %s16, 1
        // Predicated region
        $region13: #{tpu_custom_call.1} parent=11 // pred_check
          %p130 = pneg %p37
        $region14: #{tpu_custom_call.1} parent=11 // pred_check_branch
          %132 = sbr.rel (%p130) target = $region16
        $region15: #{tpu_custom_call.1} parent=11 // pred_region
          %134 = vsyncadd [#allocation3], 0
          %s135 = sshll.u32 %s0, 4
          %s136 = int_to_ptr.hbm [resolvable:$true] %s135
          %s137 = sshll.u32 [#allocation2], 4
          %s138 = int_to_ptr.vmem [resolvable:$true] %s137
          %143 = dma.hbm_to_vmem [thread:$0]  %s136, 2048, %s138, [#allocation3], 256, 256, 16
        $region16: #{tpu_custom_call.1} parent=11 // pred_fallthru
          _
      $region12: #{tpu_custom_call.1} parent=5 // pred_fallthru
        _
      %p144 = scmp.lt.s32.totalorder %s16, 4
      // Predicated region
      $region17: #{tpu_custom_call.1} parent=5 // pred_check
        %p145 = pneg %p144
      $region18: #{tpu_custom_call.1} parent=5 // pred_check_branch
        %147 = sbr.rel (%p145) target = $region20
      $region19: #{tpu_custom_call.1} parent=5 // pred_region
        // Predicated region
        $region21: #{tpu_custom_call.1} parent=19 // pred_check
          %p148 = pneg %p57
        $region22: #{tpu_custom_call.1} parent=19 // pred_check_branch
          %150 = sbr.rel (%p148) target = $region24
        $region23: #{tpu_custom_call.1} parent=19 // pred_region
          %s151 = sand.u32 %s16, 1
          %s152 = scalar_lea.sflag [#allocation6], %s151
          %s153 = sand.u32 %s47, 1
          %s154 = smul.addr %s153, 8
          %s155 = scalar_lea.vmem [#allocation5], %s154
          %157 = vsyncadd %s152, 0
          %s158 = smul.addr %s16, 8
          %s159 = scalar_lea.hbm %s1, %s158
          %s161 = sshll.u32 %s159, 4
          %s162 = int_to_ptr.hbm [resolvable:$true] %s161
          %s163 = sshll.u32 %s155, 4
          %s164 = int_to_ptr.vmem [resolvable:$true] %s163
          %166 = dma.hbm_to_vmem [thread:$0]  %s162, 128, %s164, %s152
        $region24: #{tpu_custom_call.1} parent=19 // pred_fallthru
          _
        // Predicated region
        $region25: #{tpu_custom_call.1} parent=19 // pred_check
          %p167 = pneg %p83
        $region26: #{tpu_custom_call.1} parent=19 // pred_check_branch
          %169 = sbr.rel (%p167) target = $region28
        $region27: #{tpu_custom_call.1} parent=19 // pred_region
          %s170 = sand.u32 %s16, 1
          %s171 = scalar_lea.sflag [#allocation6], %s170
          %s172 = sand.u32 %s73, 1
          %s173 = smul.addr %s172, 16
          %s174 = scalar_lea.vmem [#allocation7], %s173
          %176 = vsyncadd %s171, 0
          %s177 = smul.addr %s16, 2
          %s178 = smul.addr %s177, 8
          %s179 = scalar_lea.hbm %s2, %s178
          %s181 = sshll.u32 %s179, 4
          %s182 = int_to_ptr.hbm [resolvable:$true] %s181
          %s183 = sshll.u32 %s174, 4
          %s184 = int_to_ptr.vmem [resolvable:$true] %s183
          %186 = dma.hbm_to_vmem [thread:$0]  %s182, 256, %s184, %s171
        $region28: #{tpu_custom_call.1} parent=19 // pred_fallthru
          _
      $region20: #{tpu_custom_call.1} parent=5 // pred_fallthru
        _
      %p187 = scmp.le.s32.totalorder 1, %s16
      %p188 = scmp.lt.s32.totalorder %s16, 5
      %p189 = pnand %p187, %p188
      %p190 = pneg %p189
      // Predicated region
      $region29: #{tpu_custom_call.1} parent=5 // pred_check
        _
      $region30: #{tpu_custom_call.1} parent=5 // pred_check_branch
        %192 = sbr.rel (%p189) target = $region32
      $region31: #{tpu_custom_call.1} parent=5 // pred_region
        %s193 = ssub.s32 %s16, 1
        // Predicated region
        $region33: #{tpu_custom_call.1} parent=31 // pred_check
          %p194 = pneg %p37
        $region34: #{tpu_custom_call.1} parent=31 // pred_check_branch
          %196 = sbr.rel (%p194) target = $region36
        $region35: #{tpu_custom_call.1} parent=31 // pred_region
          %198 = dma.done [#allocation3], 2048
        $region36: #{tpu_custom_call.1} parent=31 // pred_fallthru
          _
        %s199 = sand.u32 %s21, 1
        %s200 = scalar_lea.sflag [#allocation6], %s199
        %s201 = sand.u32 %s50, 1
        %s202 = smul.addr %s201, 8
        %s203 = scalar_lea.vmem [#allocation5], %s202
        // Predicated region
        $region37: #{tpu_custom_call.1} parent=31 // pred_check
          %p204 = pneg %p63
        $region38: #{tpu_custom_call.1} parent=31 // pred_check_branch
          %206 = sbr.rel (%p204) target = $region40
        $region39: #{tpu_custom_call.1} parent=31 // pred_region
          %208 = dma.done %s200, 128
        $region40: #{tpu_custom_call.1} parent=31 // pred_fallthru
          _
        %s209 = sand.u32 %s21, 1
        %s210 = scalar_lea.sflag [#allocation6], %s209
        %s211 = sand.u32 %s76, 1
        %s212 = smul.addr %s211, 16
        %s213 = scalar_lea.vmem [#allocation7], %s212
        // Predicated region
        $region41: #{tpu_custom_call.1} parent=31 // pred_check
          %p214 = pneg %p89
        $region42: #{tpu_custom_call.1} parent=31 // pred_check_branch
          %216 = sbr.rel (%p214) target = $region44
        $region43: #{tpu_custom_call.1} parent=31 // pred_region
          %218 = dma.done %s210, 256
        $region44: #{tpu_custom_call.1} parent=31 // pred_fallthru
          _
        %p219 = pneg %p37
        %p220 = pneg %p34
        %s221 = sand.u32 %s21, 1
        %s222 = scalar_lea.sflag [#allocation6], %s221
        %s223 = sand.u32 %s50, 1
        %s224 = smul.addr %s223, 8
        %s225 = scalar_lea.vmem [#allocation5], %s224
        %p226 = pneg %p63
        %p227 = pneg %p60
        %s228 = sand.u32 %s21, 1
        %s229 = scalar_lea.sflag [#allocation6], %s228
        %s230 = sand.u32 %s76, 1
        %s231 = smul.addr %s230, 16
        %s232 = scalar_lea.vmem [#allocation7], %s231
        %p233 = pneg %p89
        %p234 = pneg %p86
        %p235 = pneg %p115
        %p236 = pneg %p112
        %s237 = sand.u32 %s102, 1
        %s238 = scalar_lea.sflag [#allocation4], %s237
        %s239 = sand.u32 %s102, 1
        %s240 = smul.addr %s239, 16
        %s241 = scalar_lea.vmem [#allocation8], %s240
        %v242 = vld [vmem:[%s203] sm:$0xff]
        %v243 = vld [vmem:[#allocation2] sm:$0xff]
        %v244 = vld [vmem:[#allocation2 + $0x8] sm:$0xff]
        %v245 = vld [vmem:[#allocation2 + $0x10] sm:$0xff]
        %v246 = vld [vmem:[#allocation2 + $0x18] sm:$0xff]
        %v247 = vld [vmem:[#allocation2 + $0x20] sm:$0xff]
        %v248 = vld [vmem:[#allocation2 + $0x28] sm:$0xff]
        %v249 = vld [vmem:[#allocation2 + $0x30] sm:$0xff]
        %v250 = vld [vmem:[#allocation2 + $0x38] sm:$0xff]
        %v251 = vld [vmem:[#allocation2 + $0x40] sm:$0xff]
        %v252 = vld [vmem:[#allocation2 + $0x48] sm:$0xff]
        %v253 = vld [vmem:[#allocation2 + $0x50] sm:$0xff]
        %v254 = vld [vmem:[#allocation2 + $0x58] sm:$0xff]
        %v255 = vld [vmem:[#allocation2 + $0x60] sm:$0xff]
        %v256 = vld [vmem:[#allocation2 + $0x68] sm:$0xff]
        %v257 = vld [vmem:[#allocation2 + $0x70] sm:$0xff]
        %v258 = vld [vmem:[#allocation2 + $0x78] sm:$0xff]
        %v259 = vld [vmem:[%s213] sm:$0xff]
        %v260 = vld [vmem:[%s213 + $0x8] sm:$0xff]
        %vm261 = vcmask 523264
        %v263 = vsel %vm261, %v242, 0
        %265 = vmatpush.msra.mxu0 0.0
        %266 = vmatpush.msra.mxu0 0.0
        %267 = vmatpush.msra.mxu0 0.0
        %268 = vmatpush.msra.mxu0 0.0
        %269 = vmatpush.msra.mxu0 0.0
        %270 = vmatpush.msra.mxu0 0.0
        %271 = vmatpush.msra.mxu0 0.0
        %272 = vmatpush.msra.mxu0 0.0
        %273 = vmatpush.msra.mxu0 %v257
        %274 = vmatpush.msra.mxu0 %v255
        %275 = vmatpush.msra.mxu0 %v253
        %276 = vmatpush.msra.mxu0 %v251
        %277 = vmatpush.msra.mxu0 %v249
        %278 = vmatpush.msra.mxu0 %v247
        %279 = vmatpush.msra.mxu0 %v245
        %280 = vmatpush.msra.mxu0 %v243
        %281 = vmatmul.f32.gmra.mxu0 %v263
        %v282 = vpop.f32.mrf.mxu0
        %v283 = vadd.f32 %v259, %v282
        %284 = vdwg.mxu0
        %285 = vmatpush.msra.mxu0 0.0
        %286 = vmatpush.msra.mxu0 0.0
        %287 = vmatpush.msra.mxu0 0.0
        %288 = vmatpush.msra.mxu0 0.0
        %289 = vmatpush.msra.mxu0 0.0
        %290 = vmatpush.msra.mxu0 0.0
        %291 = vmatpush.msra.mxu0 0.0
        %292 = vmatpush.msra.mxu0 0.0
        %293 = vmatpush.msra.mxu0 %v258
        %294 = vmatpush.msra.mxu0 %v256
        %295 = vmatpush.msra.mxu0 %v254
        %296 = vmatpush.msra.mxu0 %v252
        %297 = vmatpush.msra.mxu0 %v250
        %298 = vmatpush.msra.mxu0 %v248
        %299 = vmatpush.msra.mxu0 %v246
        %300 = vmatpush.msra.mxu0 %v244
        %301 = vmatmul.f32.gmra.mxu0 %v263
        %v302 = vpop.f32.mrf.mxu0
        %v303 = vadd.f32 %v260, %v302
        %304 = vdwg.mxu0
        %305 = vst [vmem:[%s241] sm:$0xff] %v283
        %306 = vst [vmem:[%s241 + $0x8] sm:$0xff] %v303
        %s307 = sand.u32 %s102, 1
        %s308 = scalar_lea.sflag [#allocation4], %s307
        %s309 = sand.u32 %s102, 1
        %s310 = smul.addr %s309, 16
        %s311 = scalar_lea.vmem [#allocation8], %s310
        // Predicated region
        $region45: #{tpu_custom_call.1} parent=31 // pred_check
          %p312 = pneg %p112
        $region46: #{tpu_custom_call.1} parent=31 // pred_check_branch
          %314 = sbr.rel (%p312) target = $region48
        $region47: #{tpu_custom_call.1} parent=31 // pred_region
          %316 = vsyncadd %s308, 0
          %s317 = smul.addr %s21, 2
          %s318 = smul.addr %s317, 8
          %s319 = scalar_lea.hbm %s3, %s318
          %s321 = sshll.u32 %s311, 4
          %s322 = int_to_ptr.vmem [resolvable:$true] %s321
          %s323 = sshll.u32 %s319, 4
          %s324 = int_to_ptr.hbm [resolvable:$true] %s323
          %326 = dma.vmem_to_hbm [thread:$0]  %s322, 256, %s324, %s308
        $region48: #{tpu_custom_call.1} parent=31 // pred_fallthru
          _
      $region32: #{tpu_custom_call.1} parent=5 // pred_fallthru
        _
      %p327 = scmp.le.s32.totalorder 2, %s16
      // Predicated region
      $region49: #{tpu_custom_call.1} parent=5 // pred_check
        %p328 = pneg %p327
      $region50: #{tpu_custom_call.1} parent=5 // pred_check_branch
        %330 = sbr.rel (%p328) target = $region52
      $region51: #{tpu_custom_call.1} parent=5 // pred_region
        %s331 = ssub.s32 %s16, 2
        // Predicated region
        $region53: #{tpu_custom_call.1} parent=51 // pred_check
          %p332 = pneg %p118
        $region54: #{tpu_custom_call.1} parent=51 // pred_check_branch
          %334 = sbr.rel (%p332) target = $region56
        $region55: #{tpu_custom_call.1} parent=51 // pred_region
          %s335 = sand.u32 %s103, 1
          %s336 = scalar_lea.sflag [#allocation4], %s335
          %s337 = sand.u32 %s103, 1
          %s338 = smul.addr %s337, 16
          %s339 = scalar_lea.vmem [#allocation8], %s338
          %341 = dma.done %s336, 256
        $region56: #{tpu_custom_call.1} parent=51 // pred_fallthru
          _
      $region52: #{tpu_custom_call.1} parent=5 // pred_fallthru
        _
    $region6: #{tpu_custom_call.1} parent=1 // loop_footer
      %s20 = sadd.s32 1, %s16
    $region7: #{tpu_custom_call.1} parent=1 // loop_footer_branch
      %15 = sbr.rel target = $region3
    $region8: #{tpu_custom_call.1} parent=1 // loop_exit
      _
    %342 = vsyncpa [#allocation3], 1
    %s343 = scalar_lea.sflag [#allocation3], 1
    %344 = vsyncpa %s343, 1
    %345 = vsyncpa [#allocation6], 1
    %s346 = scalar_lea.sflag [#allocation6], 1
    %347 = vsyncpa %s346, 1
    %348 = vsyncpa [#allocation4], 1
    %s349 = scalar_lea.sflag [#allocation4], 1
    %350 = vsyncpa %s349, 1

</llo_original>
